<compile_context>
chip_gen: v5e
topology: v5e:2x2
jax: 0.10.0
libtpu: 0.0.40
codegen_flags: <defaults>
</compile_context>

<pallas_src>
import numpy as np
import jax
import jax.numpy as jnp
from jax.experimental import pallas as pl
from jax.experimental.pallas import tpu as pltpu

# --------------------------------------------------------------------------
# problem constants (from the PyTorch script)
# --------------------------------------------------------------------------
Ns = 50000
k = 4
n = 2
R = k / n
Ts = 1e-06
fd = 926

IN_CHANNELS = 2 ** k          # 16
COMPRESSED_DIM = 2 * n        # 4
TRAIN_SNR_DB = 7.0            # hard-coded in RTN.forward
NORM_SCALE = float(COMPRESSED_DIM) ** 0.5
NOISE_SIGMA = float(1.0 / np.sqrt(2.0 * R * (10.0 ** (TRAIN_SNR_DB / 10.0))))


def Jakes_Flat(fd, Ts, Ns, t0=0, E0=1, phi_N=0):
    N0 = 8
    N = 4 * N0 + 2
    wd = 2 * np.pi * fd
    t = t0 + np.asarray([i for i in range(0, Ns)]) * Ts
    H = np.ones((2, Ns))
    coff = E0 / np.sqrt(2 * N0 + 1)
    phi_n = np.asarray([np.pi * i / (N0 + 1) for i in range(1, N0 + 1)])
    phi_N = 0
    w_n = np.asarray([wd * np.cos(2 * np.pi * i / N) for i in range(1, N0 + 1)])
    h_i = np.ones((N0 + 1, Ns))
    for i in range(N0):
        h_i[i, :] = 2 * np.cos(phi_n[i]) * np.cos(w_n[i] * t)
    h_i[N0, :] = np.sqrt(2) * np.cos(phi_N) * np.cos(wd * t)
    h_q = np.ones((N0 + 1, Ns))
    for i in range(N0):
        h_q[i, :] = 2 * np.sin(phi_n[i]) * np.cos(w_n[i] * t)
    h_q[N0, :] = np.sqrt(2) * np.sin(phi_N) * np.cos(wd * t)
    h_I = coff * np.sum(h_i, 0)
    h_Q = coff * np.sum(h_q, 0)
    H[0, :] = h_I
    H[1, :] = h_Q
    return H


h_fading = Jakes_Flat(fd, Ts, Ns)


# --------------------------------------------------------------------------
# packed parameter slab layout (sublane-aligned row offsets, 16 lanes wide)
# --------------------------------------------------------------------------
def _align8(x):
    return (x + 7) & ~7


OFF_W1 = 0                                      # (16, 16)  -- b1 folded in
OFF_W2 = _align8(OFF_W1 + IN_CHANNELS)          # (4, 16)
OFF_B2 = _align8(OFF_W2 + COMPRESSED_DIM)       # (4, 1)
OFF_CT = _align8(OFF_B2 + COMPRESSED_DIM)       # (4, 4)   channel matrix^T
OFF_W3 = _align8(OFF_CT + COMPRESSED_DIM)       # (16, 4)
OFF_B3 = _align8(OFF_W3 + IN_CHANNELS)          # (16, 1)
OFF_W4 = _align8(OFF_B3 + IN_CHANNELS)          # (16, 16)
OFF_B4 = _align8(OFF_W4 + IN_CHANNELS)          # (16, 1)
SLAB_ROWS = _align8(OFF_B4 + IN_CHANNELS)       # 104
SLAB_COLS = IN_CHANNELS                         # 16


def pack_params(w1, b1, w2, b2, channel_mat_T, w3, b3, w4, b4):
    """One f32 slab = one input stream.  b1 folded into w1 (exact: the
    encoder input is strictly one-hot, so W1 @ onehot + b1 == (W1 + b1)[:, lab])."""
    slab = np.zeros((SLAB_ROWS, SLAB_COLS), dtype=np.float32)
    w1p = np.asarray(w1, np.float32) + np.asarray(b1, np.float32)[:, None]
    slab[OFF_W1:OFF_W1 + IN_CHANNELS, :IN_CHANNELS] = w1p
    slab[OFF_W2:OFF_W2 + COMPRESSED_DIM, :IN_CHANNELS] = np.asarray(w2, np.float32)
    slab[OFF_B2:OFF_B2 + COMPRESSED_DIM, 0] = np.asarray(b2, np.float32)
    slab[OFF_CT:OFF_CT + COMPRESSED_DIM, :COMPRESSED_DIM] = np.asarray(channel_mat_T, np.float32)
    slab[OFF_W3:OFF_W3 + IN_CHANNELS, :COMPRESSED_DIM] = np.asarray(w3, np.float32)
    slab[OFF_B3:OFF_B3 + IN_CHANNELS, 0] = np.asarray(b3, np.float32)
    slab[OFF_W4:OFF_W4 + IN_CHANNELS, :IN_CHANNELS] = np.asarray(w4, np.float32)
    slab[OFF_B4:OFF_B4 + IN_CHANNELS, 0] = np.asarray(b4, np.float32)
    return jnp.asarray(slab)


# --------------------------------------------------------------------------
# kernel: one-hot -> encoder -> normalization -> fading channel + AWGN -> decoder
# everything in (features, batch) "batch-on-lanes" layout
# --------------------------------------------------------------------------
def rtn_kernel(labels_ref, noise_ref, slab_ref, out_ref):
    tb = out_ref.shape[-1]

    # static carve-outs from the packed parameter slab (one DMA stream)
    w1 = slab_ref[OFF_W1:OFF_W1 + IN_CHANNELS, :IN_CHANNELS]     # b1 already folded in
    w2 = slab_ref[OFF_W2:OFF_W2 + COMPRESSED_DIM, :IN_CHANNELS]
    b2 = slab_ref[OFF_B2:OFF_B2 + COMPRESSED_DIM, 0:1]
    cT = slab_ref[OFF_CT:OFF_CT + COMPRESSED_DIM, :COMPRESSED_DIM]
    w3 = slab_ref[OFF_W3:OFF_W3 + IN_CHANNELS, :COMPRESSED_DIM]
    b3 = slab_ref[OFF_B3:OFF_B3 + IN_CHANNELS, 0:1]
    w4 = slab_ref[OFF_W4:OFF_W4 + IN_CHANNELS, :IN_CHANNELS]
    b4 = slab_ref[OFF_B4:OFF_B4 + IN_CHANNELS, 0:1]

    # ---- rebuild one-hot messages in-kernel: x (in_channels, tb) ----
    lab = labels_ref[...]                                            # (1, tb) int32
    rows = jax.lax.broadcasted_iota(jnp.int32, (IN_CHANNELS, tb), 0)
    x = (rows == lab).astype(jnp.float32)

    # ---- encoder: Linear(+b1 folded) -> ReLU -> Linear ----
    h1 = jnp.maximum(jnp.dot(w1, x, preferred_element_type=jnp.float32), 0.0)
    enc = jnp.dot(w2, h1, preferred_element_type=jnp.float32) + b2

    # ---- normalization: sqrt(cd) * x / ||x||_2 (per sample == per lane) ----
    sumsq = jnp.sum(enc * enc, axis=0, keepdims=True)                # (1, tb)
    enc = enc * (NORM_SCALE * jax.lax.rsqrt(jnp.maximum(sumsq, 1e-30)))

    # ---- Rayleigh flat-fading channel (complex mult as 4x4 block-diag matmul) + AWGN ----
    y = jnp.dot(cT, enc, preferred_element_type=jnp.float32) + noise_ref[...]

    # ---- decoder: Linear -> ReLU -> Linear ----
    h2 = jnp.maximum(jnp.dot(w3, y, preferred_element_type=jnp.float32) + b3, 0.0)
    out = jnp.dot(w4, h2, preferred_element_type=jnp.float32) + b4

    out_ref[...] = out.astype(out_ref.dtype)


def _pick_batch_tile(B):
    # At most a 2-step "parallel" grid: both v7x TensorCores get work while
    # single-TC chips (v5e/v6e) pay at most one extra ~0.35us grid step.
    # This kernel is step-overhead bound, so never shrink tb below B/2.
    if B >= 256 and B % 256 == 0:
        return B // 2
    return B


def rtn_forward(labels, noise, param_slab, *, tb=None):
    """labels: (B,) int32 message indices; noise: (COMPRESSED_DIM, B) f32 AWGN.
    Returns logits in (IN_CHANNELS, B) layout (batch on lanes); transpose
    outside the kernel if the PyTorch (B, IN_CHANNELS) convention is needed."""
    B = int(labels.shape[0])
    if tb is None:
        tb = _pick_batch_tile(B)
    assert B % tb == 0 and tb % 128 == 0, "batch / tile must be lane-aligned"
    n_steps = B // tb

    labels2d = labels.reshape(1, B).astype(jnp.int32)

    flops_per_sample = 2 * (2 * IN_CHANNELS * IN_CHANNELS
                            + 2 * IN_CHANNELS * COMPRESSED_DIM
                            + COMPRESSED_DIM * COMPRESSED_DIM) + 64
    cost = pl.CostEstimate(
        flops=B * flops_per_sample,
        transcendentals=B,                                       # rsqrt per sample
        bytes_accessed=B * (4 + 4 * COMPRESSED_DIM + 4 * IN_CHANNELS)
                       + SLAB_ROWS * SLAB_COLS * 4,
    )

    return pl.pallas_call(
        rtn_kernel,
        out_shape=jax.ShapeDtypeStruct((IN_CHANNELS, B), jnp.float32),
        grid=(n_steps,),
        in_specs=[
            pl.BlockSpec((1, tb), lambda i: (0, i)),                    # labels (batch tiled)
            pl.BlockSpec((COMPRESSED_DIM, tb), lambda i: (0, i)),       # AWGN   (batch tiled)
            pl.BlockSpec((SLAB_ROWS, SLAB_COLS), lambda i: (0, 0)),     # packed params (resident)
        ],
        out_specs=pl.BlockSpec((IN_CHANNELS, tb), lambda i: (0, i)),
        compiler_params=pltpu.CompilerParams(
            dimension_semantics=("parallel",),    # both v7x TCs when n_steps == 2
            vmem_limit_bytes=8 << 20,             # tiles are tiny; VMEM never binds
        ),
        cost_estimate=cost,
    )(labels2d, noise, param_slab)


# --------------------------------------------------------------------------
# deterministic parameter / input construction, pure-JAX reference, driver
# --------------------------------------------------------------------------
def init_linear(key, fan_in, fan_out):
    """PyTorch nn.Linear-style uniform init, stored as (out, in) / (out,)."""
    kw, kb = jax.random.split(key)
    bound = 1.0 / np.sqrt(fan_in)
    w = jax.random.uniform(kw, (fan_out, fan_in), jnp.float32, -bound, bound)
    b = jax.random.uniform(kb, (fan_out,), jnp.float32, -bound, bound)
    return w, b


def rtn_reference(labels, w1, b1, w2, b2, H0, H1, noise_bt, w3, b3, w4, b4):
    """Pure-JAX mirror of RTN.forward in the original (batch, features) layout."""
    x = jax.nn.one_hot(labels, IN_CHANNELS, dtype=jnp.float32)
    h1 = jax.nn.relu(x @ w1.T + b1)
    enc = h1 @ w2.T + b2
    enc = NORM_SCALE * enc / jnp.linalg.norm(enc, axis=-1, keepdims=True)
    xc = enc.reshape(enc.shape[0], -1, 2)
    real = H0 * xc[:, :, 0] - H1 * xc[:, :, 1]
    imag = H0 * xc[:, :, 1] + H1 * xc[:, :, 0]
    y = jnp.stack([real, imag], axis=2).reshape(enc.shape[0], -1) + noise_bt
    h2 = jax.nn.relu(y @ w3.T + b3)
    return h2 @ w4.T + b4


if __name__ == "__main__":
    key = jax.random.PRNGKey(0)
    k_l1, k_l2, k_l3, k_l4, k_idx, k_awgn = jax.random.split(key, 6)

    B = 1024   # batch (on lanes); _pick_batch_tile -> tb = 512, grid = 2 ("parallel")

    # message labels (the autoencoder is driven with one-hot messages; the
    # one-hot is rebuilt inside the kernel from these labels)
    labels = jax.random.randint(k_idx, (B,), 0, IN_CHANNELS, dtype=jnp.int32)

    # encoder / decoder parameters (PyTorch (out, in) orientation)
    w1, b1 = init_linear(k_l1, IN_CHANNELS, IN_CHANNELS)        # encoder[0]
    w2, b2 = init_linear(k_l2, IN_CHANNELS, COMPRESSED_DIM)     # encoder[2]
    w3, b3 = init_linear(k_l3, COMPRESSED_DIM, IN_CHANNELS)     # decoder[0]
    w4, b4 = init_linear(k_l4, IN_CHANNELS, IN_CHANNELS)        # decoder[2]

    # deterministic "random" fading tap from the Jakes vector (one per forward,
    # applied batch-wide exactly as in the PyTorch module)
    rng = np.random.RandomState(0)
    idx = int(rng.randint(0, Ns))
    H0 = float(h_fading[0, idx])
    H1 = float(h_fading[1, idx])
    # row-layout channel acts as x_pair @ [[H0, H1], [-H1, H0]]; in the
    # transposed (features, batch) layout we apply its transpose on the left.
    M_T = np.array([[H0, -H1], [H1, H0]], dtype=np.float32)
    channel_mat_T = np.kron(np.eye(COMPRESSED_DIM // 2, dtype=np.float32), M_T)

    param_slab = pack_params(w1, b1, w2, b2, channel_mat_T, w3, b3, w4, b4)

    # AWGN realization (torch.randn equivalent), generated host-side so the
    # kernel is deterministic and portable; (features, batch) layout.
    # TODO(synk): in-kernel pltpu HW PRNG would avoid this HBM stream but has
    # no CPU-interpret lowering and is not bit-identical to torch.randn anyway.
    noise = NOISE_SIGMA * jax.random.normal(k_awgn, (COMPRESSED_DIM, B), jnp.float32)

    out = rtn_forward(labels, noise, param_slab)
    out = jax.block_until_ready(out)

    assert out.shape == (IN_CHANNELS, B) and out.dtype == jnp.float32
    assert bool(jnp.all(jnp.isfinite(out)))

    # pure-JAX reference check (same weights, same fading tap, same noise)
    ref = rtn_reference(labels, w1, b1, w2, b2, H0, H1, noise.T, w3, b3, w4, b4)
    assert bool(jnp.allclose(out.T, ref, rtol=5e-4, atol=5e-4))

    print("KERNEL_OK")
</pallas_src>

<mosaic_0001>
module attributes {stable_mosaic.version = 11 : i64} {
  func.func @rtn_kernel(%arg0: i32, %arg1: memref<1x512xi32, #tpu.memory_space<vmem>>, %arg2: memref<4x512xf32, #tpu.memory_space<vmem>>, %arg3: memref<104x16xf32, #tpu.memory_space<vmem>>, %arg4: memref<16x512xf32, #tpu.memory_space<vmem>>) attributes {dimension_semantics = [#tpu.dimension_semantics<parallel>], iteration_bounds = array<i64: 2>, scalar_prefetch = 0 : i64, scratch_operands = 0 : i64, tpu.core_type = #tpu.core_type<tc>, window_params = [{transform_indices = @transform_0, window_bounds = array<i64: 1, 512>}, {transform_indices = @transform_1, window_bounds = array<i64: 4, 512>}, {pipeline_mode = #tpu.pipeline_mode<synchronous>, transform_indices = @transform_2, window_bounds = array<i64: 104, 16>}, {transform_indices = @transform_3, window_bounds = array<i64: 16, 512>}]} {
    %c0 = arith.constant 0 : index
    %c0_0 = arith.constant 0 : index
    %0 = vector.load %arg3[%c0, %c0_0] : memref<104x16xf32, #tpu.memory_space<vmem>>, vector<16x16xf32>
    %c16 = arith.constant 16 : index
    %c0_1 = arith.constant 0 : index
    %1 = vector.load %arg3[%c16, %c0_1] : memref<104x16xf32, #tpu.memory_space<vmem>>, vector<4x16xf32>
    %c24 = arith.constant 24 : index
    %c0_2 = arith.constant 0 : index
    %2 = vector.load %arg3[%c24, %c0_2] : memref<104x16xf32, #tpu.memory_space<vmem>>, vector<4x1xf32>
    %c32 = arith.constant 32 : index
    %c0_3 = arith.constant 0 : index
    %3 = vector.load %arg3[%c32, %c0_3] : memref<104x16xf32, #tpu.memory_space<vmem>>, vector<4x4xf32>
    %c40 = arith.constant 40 : index
    %c0_4 = arith.constant 0 : index
    %4 = vector.load %arg3[%c40, %c0_4] : memref<104x16xf32, #tpu.memory_space<vmem>>, vector<16x4xf32>
    %c56 = arith.constant 56 : index
    %c0_5 = arith.constant 0 : index
    %5 = vector.load %arg3[%c56, %c0_5] : memref<104x16xf32, #tpu.memory_space<vmem>>, vector<16x1xf32>
    %c72 = arith.constant 72 : index
    %c0_6 = arith.constant 0 : index
    %6 = vector.load %arg3[%c72, %c0_6] : memref<104x16xf32, #tpu.memory_space<vmem>>, vector<16x16xf32>
    %c88 = arith.constant 88 : index
    %c0_7 = arith.constant 0 : index
    %7 = vector.load %arg3[%c88, %c0_7] : memref<104x16xf32, #tpu.memory_space<vmem>>, vector<16x1xf32>
    %c0_8 = arith.constant 0 : index
    %c0_9 = arith.constant 0 : index
    %8 = vector.load %arg1[%c0_8, %c0_9] : memref<1x512xi32, #tpu.memory_space<vmem>>, vector<1x512xi32>
    %9 = tpu.iota {dimensions = array<i32: 0>} : vector<16x512xi32>
    %10 = vector.broadcast %8 : vector<1x512xi32> to vector<16x512xi32>
    %11 = arith.cmpi eq, %9, %10 : vector<16x512xi32>
    %12 = arith.extui %11 : vector<16x512xi1> to vector<16x512xi32>
    %13 = arith.sitofp %12 : vector<16x512xi32> to vector<16x512xf32>
    %cst = arith.constant dense<0.000000e+00> : vector<16x512xf32>
    %14 = tpu.matmul %0, %13, %cst {dimension_numbers = #tpu.dot_dimension_numbers<[1], [0], [0], [1], [0, 0, 1, 1], [], []>} : vector<16x16xf32>, vector<16x512xf32>, vector<16x512xf32> -> vector<16x512xf32>
    %cst_10 = arith.constant 0.000000e+00 : f32
    %15 = vector.broadcast %cst_10 : f32 to vector<16x512xf32>
    %16 = arith.maximumf %14, %15 : vector<16x512xf32>
    %cst_11 = arith.constant dense<0.000000e+00> : vector<4x512xf32>
    %17 = tpu.matmul %1, %16, %cst_11 {dimension_numbers = #tpu.dot_dimension_numbers<[1], [0], [0], [1], [0, 0, 1, 1], [], []>} : vector<4x16xf32>, vector<16x512xf32>, vector<4x512xf32> -> vector<4x512xf32>
    %18 = vector.broadcast %2 : vector<4x1xf32> to vector<4x512xf32>
    %19 = arith.addf %17, %18 : vector<4x512xf32>
    %20 = arith.mulf %19, %19 : vector<4x512xf32>
    %cst_12 = arith.constant dense<0.000000e+00> : vector<512xf32>
    %21 = vector.multi_reduction <add>, %20, %cst_12 [0] : vector<4x512xf32> to vector<512xf32>
    %22 = vector.shape_cast %21 : vector<512xf32> to vector<1x512xf32>
    %cst_13 = arith.constant 1.000000e-30 : f32
    %23 = vector.broadcast %cst_13 : f32 to vector<1x512xf32>
    %24 = arith.maximumf %22, %23 : vector<1x512xf32>
    %25 = math.rsqrt %24 : vector<1x512xf32>
    %cst_14 = arith.constant 2.000000e+00 : f32
    %26 = vector.broadcast %cst_14 : f32 to vector<1x512xf32>
    %27 = arith.mulf %26, %25 : vector<1x512xf32>
    %28 = vector.broadcast %27 : vector<1x512xf32> to vector<4x512xf32>
    %29 = arith.mulf %19, %28 : vector<4x512xf32>
    %cst_15 = arith.constant dense<0.000000e+00> : vector<4x512xf32>
    %30 = tpu.matmul %3, %29, %cst_15 {dimension_numbers = #tpu.dot_dimension_numbers<[1], [0], [0], [1], [0, 0, 1, 1], [], []>} : vector<4x4xf32>, vector<4x512xf32>, vector<4x512xf32> -> vector<4x512xf32>
    %c0_16 = arith.constant 0 : index
    %c0_17 = arith.constant 0 : index
    %31 = vector.load %arg2[%c0_16, %c0_17] : memref<4x512xf32, #tpu.memory_space<vmem>>, vector<4x512xf32>
    %32 = arith.addf %30, %31 : vector<4x512xf32>
    %cst_18 = arith.constant dense<0.000000e+00> : vector<16x512xf32>
    %33 = tpu.matmul %4, %32, %cst_18 {dimension_numbers = #tpu.dot_dimension_numbers<[1], [0], [0], [1], [0, 0, 1, 1], [], []>} : vector<16x4xf32>, vector<4x512xf32>, vector<16x512xf32> -> vector<16x512xf32>
    %34 = vector.broadcast %5 : vector<16x1xf32> to vector<16x512xf32>
    %35 = arith.addf %33, %34 : vector<16x512xf32>
    %cst_19 = arith.constant 0.000000e+00 : f32
    %36 = vector.broadcast %cst_19 : f32 to vector<16x512xf32>
    %37 = arith.maximumf %35, %36 : vector<16x512xf32>
    %cst_20 = arith.constant dense<0.000000e+00> : vector<16x512xf32>
    %38 = tpu.matmul %6, %37, %cst_20 {dimension_numbers = #tpu.dot_dimension_numbers<[1], [0], [0], [1], [0, 0, 1, 1], [], []>} : vector<16x16xf32>, vector<16x512xf32>, vector<16x512xf32> -> vector<16x512xf32>
    %39 = vector.broadcast %7 : vector<16x1xf32> to vector<16x512xf32>
    %40 = arith.addf %38, %39 : vector<16x512xf32>
    %c0_21 = arith.constant 0 : index
    %c0_22 = arith.constant 0 : index
    %41 = vector.load %arg4[%c0_21, %c0_22] : memref<16x512xf32, #tpu.memory_space<vmem>>, vector<16x512xf32>
    tpu.vector_store %arg4[%c0_21, %c0_22], %40 {strides = array<i32>} : memref<16x512xf32, #tpu.memory_space<vmem>>, vector<16x512xf32>,
    return
  }
  func.func @transform_0(%arg0: i32) -> (i32, i32) {
    %c0_i32 = arith.constant 0 : i32
    %c0_i32_0 = arith.constant 0 : i32
    return %c0_i32, %arg0 : i32, i32
  }
  func.func @transform_1(%arg0: i32) -> (i32, i32) {
    %c0_i32 = arith.constant 0 : i32
    %c0_i32_0 = arith.constant 0 : i32
    return %c0_i32, %arg0 : i32, i32
  }
  func.func @transform_2(%arg0: i32) -> (i32, i32) {
    %c0_i32 = arith.constant 0 : i32
    %c0_i32_0 = arith.constant 0 : i32
    %c0_i32_1 = arith.constant 0 : i32
    return %c0_i32, %c0_i32_0 : i32, i32
  }
  func.func @transform_3(%arg0: i32) -> (i32, i32) {
    %c0_i32 = arith.constant 0 : i32
    %c0_i32_0 = arith.constant 0 : i32
    return %c0_i32, %arg0 : i32, i32
  }
}

</mosaic_0001>

<llo_original>
// kernel: tpu_custom_call.1
$region0: #{tpu_custom_call.1}
  #allocation0 [shape = 'u32[]', space=smem, size = 0x4, offset = 0x4, fixed_abs, tag = 'smem constant byte address 0x4 - core index']
  #allocation1 [shape = 'u32[72,128]{1,0:T(1,128)}', space=vmem, size = 0x9000, scoped, tag = 'internal scratch']
  %s0 = inlined_call_operand.vmem [shape: s32[1,1024], index: 0, kind: input, shape index: {}]
  %s1 = inlined_call_operand.vmem [shape: f32[4,1024], index: 1, kind: input, shape index: {}]
  %s2 = inlined_call_operand.vmem [shape: f32[104,16], index: 2, kind: input, shape index: {}]
  %s3 = inlined_call_operand.hbm [shape: f32[16,1024], index: 3, kind: output, shape index: {}]
  %s4 = sld [smem:[#allocation0]]
  $region45: #{tpu_custom_call.1} parent=0
    _
  %s6 = ssub.s32 1, %s4
  %s7 = scalar_select 0, %s6, %s4
  $region1: #{tpu_custom_call.1} parent=0
    #allocation2 [shape = 'u8[65536]{0}', space=vmem, size = 0x10000, scoped, tag = 'output window, operand 0']
    #allocation3 [shape = 's32[2]{0}', space=sflag, size = 0x8, scoped, tag = 'scoped memory for tpu_custom_call.1']
    %8 = vsyncpa [#allocation3], 0
    %s9 = scalar_lea.sflag [#allocation3], 1
    %10 = vsyncpa %s9, 0
    loop: start=0, step=1, limit=4
    $region2: #{tpu_custom_call.1} parent=1 // loop_pre_header
      _
    $region3: #{tpu_custom_call.1} parent=1 // loop_header
      %s12 = sphi 0, %s16
      %p13 = scmp.ge.s32.totalorder %s12, 4
      %s22 = sphi 0, %s24
      %s25 = sphi 0, %s22
      %s26 = sphi 0, %s25
      %s42 = sphi 0, %s26
      %s48 = sphi 0, %s50
      %s51 = sphi 0, %s48
      %s52 = sphi 0, %s51
      %s68 = sphi 0, %s52
      %s72 = sphi 0, %s72
      %s74 = sphi 0, %s72
      %s75 = sphi 0, %s74
      %s89 = sphi 0, %s75
      %s95 = sphi 0, %s97
      %s98 = sphi 0, %s95
      %s99 = sphi 0, %s98
      %s115 = sphi 0, %s99
    $region4: #{tpu_custom_call.1} parent=1 // loop_header_branch
      %15 = sbr.rel (%p13) target = $region8
    $region5: #{tpu_custom_call.1} parent=1 // loop_body
      %s17 = ssub.s32 %s12, 1
      %s18 = ssub.s32 %s12, 2
      %s19 = sadd.s32 %s12, 1
      %s20 = ssub.s32 %s12, %s19
      %p21 = scmp.eq.s32.totalorder %s20, 0
      %s23 = sadd.s32 %s22, 1
      %s24 = scalar_select %p21, %s22, %s23
      %p27 = pneg %p21
      %p28 = scmp.eq.s32.totalorder %s12, 1
      %p29 = por %p27, %p28
      %p30 = scmp.ne.s32.totalorder %s22, %s25
      %p31 = scmp.eq.s32.totalorder %s12, 0
      %p32 = por %p30, %p31
      %p33 = scmp.ne.s32.totalorder %s22, %s25
      %p34 = scmp.eq.s32.totalorder %s17, 1
      %p35 = por %p33, %p34
      %p36 = scmp.ne.s32.totalorder %s25, %s26
      %p37 = scmp.eq.s32.totalorder %s17, 0
      %p38 = por %p36, %p37
      %p39 = scmp.ne.s32.totalorder %s25, %s26
      %p40 = scmp.eq.s32.totalorder %s18, 1
      %p41 = por %p39, %p40
      %p43 = scmp.ne.s32.totalorder %s26, %s42
      %p44 = scmp.eq.s32.totalorder %s18, 0
      %p45 = por %p43, %p44
      %s46 = ssub.s32 %s12, %s19
      %p47 = scmp.eq.s32.totalorder %s46, 0
      %s49 = sadd.s32 %s48, 1
      %s50 = scalar_select %p47, %s48, %s49
      %p53 = pneg %p47
      %p54 = scmp.eq.s32.totalorder %s12, 1
      %p55 = por %p53, %p54
      %p56 = scmp.ne.s32.totalorder %s48, %s51
      %p57 = scmp.eq.s32.totalorder %s12, 0
      %p58 = por %p56, %p57
      %p59 = scmp.ne.s32.totalorder %s48, %s51
      %p60 = scmp.eq.s32.totalorder %s17, 1
      %p61 = por %p59, %p60
      %p62 = scmp.ne.s32.totalorder %s51, %s52
      %p63 = scmp.eq.s32.totalorder %s17, 0
      %p64 = por %p62, %p63
      %p65 = scmp.ne.s32.totalorder %s51, %s52
      %p66 = scmp.eq.s32.totalorder %s18, 1
      %p67 = por %p65, %p66
      %p69 = scmp.ne.s32.totalorder %s52, %s68
      %p70 = scmp.eq.s32.totalorder %s18, 0
      %p71 = por %p69, %p70
      %s73 = sadd.s32 %s72, 1
      %p76 = scmp.eq.s32.totalorder %s12, 1
      %p77 = scmp.ne.s32.totalorder %s72, %s74
      %p78 = scmp.eq.s32.totalorder %s12, 0
      %p79 = por %p77, %p78
      %p80 = scmp.ne.s32.totalorder %s72, %s74
      %p81 = scmp.eq.s32.totalorder %s17, 1
      %p82 = por %p80, %p81
      %p83 = scmp.ne.s32.totalorder %s74, %s75
      %p84 = scmp.eq.s32.totalorder %s17, 0
      %p85 = por %p83, %p84
      %p86 = scmp.ne.s32.totalorder %s74, %s75
      %p87 = scmp.eq.s32.totalorder %s18, 1
      %p88 = por %p86, %p87
      %p90 = scmp.ne.s32.totalorder %s75, %s89
      %p91 = scmp.eq.s32.totalorder %s18, 0
      %p92 = por %p90, %p91
      %s93 = ssub.s32 %s12, %s19
      %p94 = scmp.eq.s32.totalorder %s93, 0
      %s96 = sadd.s32 %s95, 1
      %s97 = scalar_select %p94, %s95, %s96
      %p100 = pneg %p94
      %p101 = scmp.eq.s32.totalorder %s12, 1
      %p102 = por %p100, %p101
      %p103 = scmp.ne.s32.totalorder %s95, %s98
      %p104 = scmp.eq.s32.totalorder %s12, 0
      %p105 = por %p103, %p104
      %p106 = scmp.ne.s32.totalorder %s95, %s98
      %p107 = scmp.eq.s32.totalorder %s17, 1
      %p108 = por %p106, %p107
      %p109 = scmp.ne.s32.totalorder %s98, %s99
      %p110 = scmp.eq.s32.totalorder %s17, 0
      %p111 = por %p109, %p110
      %p112 = scmp.ne.s32.totalorder %s98, %s99
      %p113 = scmp.eq.s32.totalorder %s18, 1
      %p114 = por %p112, %p113
      %p116 = scmp.ne.s32.totalorder %s99, %s115
      %p117 = scmp.eq.s32.totalorder %s18, 0
      %p118 = por %p116, %p117
      %p119 = scmp.le.s32.totalorder 1, %s12
      %p120 = scmp.lt.s32.totalorder %s12, 3
      %p121 = pnand %p119, %p120
      %p122 = pneg %p121
      // Predicated region
      $region9: #{tpu_custom_call.1} parent=5 // pred_check
        _
      $region10: #{tpu_custom_call.1} parent=5 // pred_check_branch
        %124 = sbr.rel (%p121) target = $region12
      $region11: #{tpu_custom_call.1} parent=5 // pred_region
        %s125 = ssub.s32 %s12, 1
        // Predicated region
        $region13: #{tpu_custom_call.1} parent=11 // pred_check
          %p126 = pneg %p85
        $region14: #{tpu_custom_call.1} parent=11 // pred_check_branch
          %128 = sbr.rel (%p126) target = $region16
        $region15: #{tpu_custom_call.1} parent=11 // pred_region
          _
        $region16: #{tpu_custom_call.1} parent=11 // pred_fallthru
          _
      $region12: #{tpu_custom_call.1} parent=5 // pred_fallthru
        _
      %p129 = scmp.lt.s32.totalorder %s12, 2
      // Predicated region
      $region17: #{tpu_custom_call.1} parent=5 // pred_check
        %p130 = pneg %p129
      $region18: #{tpu_custom_call.1} parent=5 // pred_check_branch
        %132 = sbr.rel (%p130) target = $region20
      $region19: #{tpu_custom_call.1} parent=5 // pred_region
        // Predicated region
        $region21: #{tpu_custom_call.1} parent=19 // pred_check
          %p133 = pneg %p32
        $region22: #{tpu_custom_call.1} parent=19 // pred_check_branch
          %135 = sbr.rel (%p133) target = $region24
        $region23: #{tpu_custom_call.1} parent=19 // pred_region
          %s136 = smul.u32 4, %s12
          %p137 = scmp.lt.s32.totalorder %s136, 7
          %s138 = scalar_select %p137, %s136, 7
          %s139 = scalar_lea.vmem %s0, %s138
          %s140 = smul.u32 4, %s12
        $region24: #{tpu_custom_call.1} parent=19 // pred_fallthru
          _
        // Predicated region
        $region25: #{tpu_custom_call.1} parent=19 // pred_check
          %p141 = pneg %p58
        $region26: #{tpu_custom_call.1} parent=19 // pred_check_branch
          %143 = sbr.rel (%p141) target = $region28
        $region27: #{tpu_custom_call.1} parent=19 // pred_region
          %s144 = smul.u32 4, %s12
          %p145 = scmp.lt.s32.totalorder %s144, 7
          %s146 = scalar_select %p145, %s144, 7
          %s147 = smul.addr %s146, 4
          %s148 = scalar_lea.vmem %s1, %s147
          %s149 = smul.u32 4, %s12
        $region28: #{tpu_custom_call.1} parent=19 // pred_fallthru
          _
      $region20: #{tpu_custom_call.1} parent=5 // pred_fallthru
        _
      %p150 = scmp.le.s32.totalorder 1, %s12
      %p151 = scmp.lt.s32.totalorder %s12, 3
      %p152 = pnand %p150, %p151
      %p153 = pneg %p152
      // Predicated region
      $region29: #{tpu_custom_call.1} parent=5 // pred_check
        _
      $region30: #{tpu_custom_call.1} parent=5 // pred_check_branch
        %155 = sbr.rel (%p152) target = $region32
      $region31: #{tpu_custom_call.1} parent=5 // pred_region
        %s156 = ssub.s32 %s12, 1
        %s157 = smul.u32 4, %s17
        %p158 = scmp.lt.s32.totalorder %s157, 7
        %s159 = scalar_select %p158, %s157, 7
        %s160 = scalar_lea.vmem %s0, %s159
        %p161 = pneg %p38
        %p162 = pneg %p35
        %s163 = smul.u32 4, %s17
        %p164 = scmp.lt.s32.totalorder %s163, 7
        %s165 = scalar_select %p164, %s163, 7
        %s166 = smul.addr %s165, 4
        %s167 = scalar_lea.vmem %s1, %s166
        %p168 = pneg %p64
        %p169 = pneg %p61
        %p170 = pneg %p85
        %p171 = pneg %p82
        %p172 = pneg %p111
        %p173 = pneg %p108
        %s174 = sand.u32 %s98, 1
        %s175 = scalar_lea.sflag [#allocation3], %s174
        %s176 = sand.u32 %s98, 1
        %s177 = smul.addr %s176, 64
        %s178 = scalar_lea.vmem [#allocation2], %s177
        %s179 = smul.u32 4, %s17
        %p180 = scmp.lt.s32.totalorder %s179, 7
        %s181 = scalar_select %p180, %s179, 7
        %s182 = scalar_lea.vmem %s0, %s181
        %s183 = smul.u32 4, %s17
        %s184 = smul.u32 4, %s17
        %p185 = scmp.lt.s32.totalorder %s184, 7
        %s186 = scalar_select %p185, %s184, 7
        %s187 = smul.addr %s186, 4
        %s188 = scalar_lea.vmem %s1, %s187
        %s189 = smul.u32 4, %s17
        %s190 = smul.u32 4, %s17
        %v191 = vld [vmem:[%s2] sm:$0xff]
        %v192 = vld [vmem:[%s2 + $0x8] sm:$0xff]
        %v193 = vld [vmem:[%s2 + $0x10] sm:$0xf]
        %v194 = vld [vmem:[%s2 + $0x18] sm:$0xf]
        %v195 = vld [vmem:[%s2 + $0x20] sm:$0xf]
        %v196 = vld [vmem:[%s2 + $0x28] sm:$0xff]
        %v197 = vld [vmem:[%s2 + $0x30] sm:$0xff]
        %v198 = vld [vmem:[%s2 + $0x38] sm:$0xff]
        %v199 = vld [vmem:[%s2 + $0x40] sm:$0xff]
        %v200 = vld [vmem:[%s2 + $0x48] sm:$0xff]
        %v201 = vld [vmem:[%s2 + $0x50] sm:$0xff]
        %v202 = vld [vmem:[%s2 + $0x58] sm:$0xff]
        %v203 = vld [vmem:[%s2 + $0x60] sm:$0xff]
        %v204 = vld [vmem:[%s182] sm:$0xf]
        %v205 = vlaneseq
        %v206 = vshrl.u32 %v205, 7
        %v207 = vadd.s32 %v206, 8
        %v208 = vperm.slane %v204, 0
        %v209 = vperm.slane %v204, 1
        %v210 = vperm.slane %v204, 2
        %v211 = vperm.slane %v204, 3
        %vm212 = vcmp.eq.s32.totalorder %v206, %v208
        %vm213 = vcmp.eq.s32.totalorder %v206, %v209
        %vm214 = vcmp.eq.s32.totalorder %v206, %v210
        %vm215 = vcmp.eq.s32.totalorder %v206, %v211
        %vm216 = vcmp.eq.s32.totalorder %v207, %v208
        %vm217 = vcmp.eq.s32.totalorder %v207, %v209
        %vm218 = vcmp.eq.s32.totalorder %v207, %v210
        %vm219 = vcmp.eq.s32.totalorder %v207, %v211
        %v220 = vsel %vm212, 1, 0
        %v221 = vsel %vm213, 1, 0
        %v222 = vsel %vm214, 1, 0
        %v223 = vsel %vm215, 1, 0
        %v224 = vsel %vm216, 1, 0
        %v225 = vsel %vm217, 1, 0
        %v226 = vsel %vm218, 1, 0
        %v227 = vsel %vm219, 1, 0
        %v228 = vcvt.s32.f32 %v220
        %v229 = vcvt.s32.f32 %v221
        %v230 = vcvt.s32.f32 %v222
        %v231 = vcvt.s32.f32 %v223
        %v232 = vcvt.s32.f32 %v224
        %v233 = vcvt.s32.f32 %v225
        %v234 = vcvt.s32.f32 %v226
        %v235 = vcvt.s32.f32 %v227
        %vm236 = vcmask 130048
        %v238 = vsel %vm236, %v191, 0
        %v241 = vsel %vm236, %v192, 0
        %243 = vmatpush.msra.mxu0 0.0
        %244 = vmatpush.msra.mxu0 0.0
        %245 = vmatpush.msra.mxu0 0.0
        %246 = vmatpush.msra.mxu0 0.0
        %247 = vmatpush.msra.mxu0 0.0
        %248 = vmatpush.msra.mxu0 0.0
        %249 = vmatpush.msra.mxu0 0.0
        %250 = vmatpush.msra.mxu0 0.0
        %251 = vmatpush.msra.mxu0 0.0
        %252 = vmatpush.msra.mxu0 0.0
        %253 = vmatpush.msra.mxu0 0.0
        %254 = vmatpush.msra.mxu0 0.0
        %255 = vmatpush.msra.mxu0 0.0
        %256 = vmatpush.msra.mxu0 0.0
        %257 = vmatpush.msra.mxu0 %v232
        %258 = vmatpush.msra.mxu0 %v228
        %259 = vmatmul.f32.gmra.mxu0 %v238
        %v260 = vpop.f32.mrf.mxu0
        %v261 = vadd.f32 0.0, %v260
        %262 = vmatmul.f32.gmra.mxu0 %v241
        %v263 = vpop.f32.mrf.mxu0
        %v264 = vadd.f32 0.0, %v263
        %265 = vdwg.mxu0
        %266 = vmatpush.msra.mxu0 0.0
        %267 = vmatpush.msra.mxu0 0.0
        %268 = vmatpush.msra.mxu0 0.0
        %269 = vmatpush.msra.mxu0 0.0
        %270 = vmatpush.msra.mxu0 0.0
        %271 = vmatpush.msra.mxu0 0.0
        %272 = vmatpush.msra.mxu0 0.0
        %273 = vmatpush.msra.mxu0 0.0
        %274 = vmatpush.msra.mxu0 0.0
        %275 = vmatpush.msra.mxu0 0.0
        %276 = vmatpush.msra.mxu0 0.0
        %277 = vmatpush.msra.mxu0 0.0
        %278 = vmatpush.msra.mxu0 0.0
        %279 = vmatpush.msra.mxu0 0.0
        %280 = vmatpush.msra.mxu0 %v233
        %281 = vmatpush.msra.mxu0 %v229
        %282 = vmatmul.f32.gmra.mxu0 %v238
        %v283 = vpop.f32.mrf.mxu0
        %v284 = vadd.f32 0.0, %v283
        %285 = vmatmul.f32.gmra.mxu0 %v241
        %v286 = vpop.f32.mrf.mxu0
        %v287 = vadd.f32 0.0, %v286
        %288 = vdwg.mxu0
        %289 = vmatpush.msra.mxu0 0.0
        %290 = vmatpush.msra.mxu0 0.0
        %291 = vmatpush.msra.mxu0 0.0
        %292 = vmatpush.msra.mxu0 0.0
        %293 = vmatpush.msra.mxu0 0.0
        %294 = vmatpush.msra.mxu0 0.0
        %295 = vmatpush.msra.mxu0 0.0
        %296 = vmatpush.msra.mxu0 0.0
        %297 = vmatpush.msra.mxu0 0.0
        %298 = vmatpush.msra.mxu0 0.0
        %299 = vmatpush.msra.mxu0 0.0
        %300 = vmatpush.msra.mxu0 0.0
        %301 = vmatpush.msra.mxu0 0.0
        %302 = vmatpush.msra.mxu0 0.0
        %303 = vmatpush.msra.mxu0 %v234
        %304 = vmatpush.msra.mxu0 %v230
        %305 = vmatmul.f32.gmra.mxu0 %v238
        %v306 = vpop.f32.mrf.mxu0
        %v307 = vadd.f32 0.0, %v306
        %308 = vmatmul.f32.gmra.mxu0 %v241
        %v309 = vpop.f32.mrf.mxu0
        %v310 = vadd.f32 0.0, %v309
        %311 = vdwg.mxu0
        %312 = vmatpush.msra.mxu0 0.0
        %313 = vmatpush.msra.mxu0 0.0
        %314 = vmatpush.msra.mxu0 0.0
        %315 = vmatpush.msra.mxu0 0.0
        %316 = vmatpush.msra.mxu0 0.0
        %317 = vmatpush.msra.mxu0 0.0
        %318 = vmatpush.msra.mxu0 0.0
        %319 = vmatpush.msra.mxu0 0.0
        %320 = vmatpush.msra.mxu0 0.0
        %321 = vmatpush.msra.mxu0 0.0
        %322 = vmatpush.msra.mxu0 0.0
        %323 = vmatpush.msra.mxu0 0.0
        %324 = vmatpush.msra.mxu0 0.0
        %325 = vmatpush.msra.mxu0 0.0
        %326 = vmatpush.msra.mxu0 %v235
        %327 = vmatpush.msra.mxu0 %v231
        %328 = vmatmul.f32.gmra.mxu0 %v238
        %v329 = vpop.f32.mrf.mxu0
        %v330 = vadd.f32 0.0, %v329
        %331 = vmatmul.f32.gmra.mxu0 %v241
        %v332 = vpop.f32.mrf.mxu0
        %v333 = vadd.f32 0.0, %v332
        %334 = vdwg.mxu0
        %v335 = vmax.f32 %v261, 0.0
        %v336 = vmax.f32 %v284, 0.0
        %v337 = vmax.f32 %v307, 0.0
        %v338 = vmax.f32 %v330, 0.0
        %v339 = vmax.f32 %v264, 0.0
        %v340 = vmax.f32 %v287, 0.0
        %v341 = vmax.f32 %v310, 0.0
        %v342 = vmax.f32 %v333, 0.0
        %344 = vset.pattern.permute.xlu0 0
        %345 = vperm.xlu0 %344, %v194
        %v346 = vpop.permute.xlu0 %345
        %v349 = vsel %vm236, %v193, 0
        %351 = vmatpush.msra.mxu0 0.0
        %352 = vmatpush.msra.mxu0 0.0
        %353 = vmatpush.msra.mxu0 0.0
        %354 = vmatpush.msra.mxu0 0.0
        %355 = vmatpush.msra.mxu0 0.0
        %356 = vmatpush.msra.mxu0 0.0
        %357 = vmatpush.msra.mxu0 0.0
        %358 = vmatpush.msra.mxu0 0.0
        %359 = vmatpush.msra.mxu0 0.0
        %360 = vmatpush.msra.mxu0 0.0
        %361 = vmatpush.msra.mxu0 0.0
        %362 = vmatpush.msra.mxu0 0.0
        %363 = vmatpush.msra.mxu0 0.0
        %364 = vmatpush.msra.mxu0 0.0
        %365 = vmatpush.msra.mxu0 %v339
        %366 = vmatpush.msra.mxu0 %v335
        %367 = vmatmul.f32.gmra.mxu0 %v349
        %v368 = vpop.f32.mrf.mxu0
        %v369 = vadd.f32 %v346, %v368
        %370 = vdwg.mxu0
        %371 = vmatpush.msra.mxu0 0.0
        %372 = vmatpush.msra.mxu0 0.0
        %373 = vmatpush.msra.mxu0 0.0
        %374 = vmatpush.msra.mxu0 0.0
        %375 = vmatpush.msra.mxu0 0.0
        %376 = vmatpush.msra.mxu0 0.0
        %377 = vmatpush.msra.mxu0 0.0
        %378 = vmatpush.msra.mxu0 0.0
        %379 = vmatpush.msra.mxu0 0.0
        %380 = vmatpush.msra.mxu0 0.0
        %381 = vmatpush.msra.mxu0 0.0
        %382 = vmatpush.msra.mxu0 0.0
        %383 = vmatpush.msra.mxu0 0.0
        %384 = vmatpush.msra.mxu0 0.0
        %385 = vmatpush.msra.mxu0 %v340
        %386 = vmatpush.msra.mxu0 %v336
        %387 = vmatmul.f32.gmra.mxu0 %v349
        %v388 = vpop.f32.mrf.mxu0
        %v389 = vadd.f32 %v346, %v388
        %390 = vdwg.mxu0
        %391 = vmatpush.msra.mxu0 0.0
        %392 = vmatpush.msra.mxu0 0.0
        %393 = vmatpush.msra.mxu0 0.0
        %394 = vmatpush.msra.mxu0 0.0
        %395 = vmatpush.msra.mxu0 0.0
        %396 = vmatpush.msra.mxu0 0.0
        %397 = vmatpush.msra.mxu0 0.0
        %398 = vmatpush.msra.mxu0 0.0
        %399 = vmatpush.msra.mxu0 0.0
        %400 = vmatpush.msra.mxu0 0.0
        %401 = vmatpush.msra.mxu0 0.0
        %402 = vmatpush.msra.mxu0 0.0
        %403 = vmatpush.msra.mxu0 0.0
        %404 = vmatpush.msra.mxu0 0.0
        %405 = vmatpush.msra.mxu0 %v341
        %406 = vmatpush.msra.mxu0 %v337
        %407 = vmatmul.f32.gmra.mxu0 %v349
        %v408 = vpop.f32.mrf.mxu0
        %v409 = vadd.f32 %v346, %v408
        %410 = vdwg.mxu0
        %411 = vmatpush.msra.mxu0 0.0
        %412 = vmatpush.msra.mxu0 0.0
        %413 = vmatpush.msra.mxu0 0.0
        %414 = vmatpush.msra.mxu0 0.0
        %415 = vmatpush.msra.mxu0 0.0
        %416 = vmatpush.msra.mxu0 0.0
        %417 = vmatpush.msra.mxu0 0.0
        %418 = vmatpush.msra.mxu0 0.0
        %419 = vmatpush.msra.mxu0 0.0
        %420 = vmatpush.msra.mxu0 0.0
        %421 = vmatpush.msra.mxu0 0.0
        %422 = vmatpush.msra.mxu0 0.0
        %423 = vmatpush.msra.mxu0 0.0
        %424 = vmatpush.msra.mxu0 0.0
        %425 = vmatpush.msra.mxu0 %v342
        %426 = vmatpush.msra.mxu0 %v338
        %427 = vmatmul.f32.gmra.mxu0 %v349
        %v428 = vpop.f32.mrf.mxu0
        %v429 = vadd.f32 %v346, %v428
        %430 = vdwg.mxu0
        %v431 = vmul.f32 %v369, %v369
        %v432 = vmul.f32 %v389, %v389
        %v433 = vmul.f32 %v409, %v409
        %v434 = vmul.f32 %v429, %v429
        %vm435 = vcmask 1043456
        %v436 = vsel %vm435, %v431, 0.0
        %v437 = vrot.slane %v436, 4
        %v438 = vadd.f32 %v436, %v437
        %v439 = vrot.slane %v438, 2
        %v440 = vadd.f32 %v438, %v439
        %v441 = vrot.slane %v440, 1
        %v442 = vadd.f32 %v440, %v441
        %v443 = vsel %vm435, %v432, 0.0
        %v444 = vrot.slane %v443, 4
        %v445 = vadd.f32 %v443, %v444
        %v446 = vrot.slane %v445, 2
        %v447 = vadd.f32 %v445, %v446
        %v448 = vrot.slane %v447, 1
        %v449 = vadd.f32 %v447, %v448
        %v450 = vsel %vm435, %v433, 0.0
        %v451 = vrot.slane %v450, 4
        %v452 = vadd.f32 %v450, %v451
        %v453 = vrot.slane %v452, 2
        %v454 = vadd.f32 %v452, %v453
        %v455 = vrot.slane %v454, 1
        %v456 = vadd.f32 %v454, %v455
        %v457 = vsel %vm435, %v434, 0.0
        %v458 = vrot.slane %v457, 4
        %v459 = vadd.f32 %v457, %v458
        %v460 = vrot.slane %v459, 2
        %v461 = vadd.f32 %v459, %v460
        %v462 = vrot.slane %v461, 1
        %v463 = vadd.f32 %v461, %v462
        %v464 = vmax.f32 %v442, 1e-30
        %v465 = vmax.f32 %v449, 1e-30
        %v466 = vmax.f32 %v456, 1e-30
        %v467 = vmax.f32 %v463, 1e-30
        %v468 = vrsqrt.pop %v464
        %v469 = vmul.f32 %v468, %v464
        %v470 = vmul.f32 %v469, %v468
        %v471 = vmul.f32 0.5, %v470
        %v472 = vsub.f32 1.5, %v471
        %v473 = vmul.f32 %v468, %v472
        %vm474 = vweird.f32 %v464
        %vm475 = vweird.f32 %v468
        %vm476 = vmor %vm474, %vm475
        %v477 = vsel %vm476, %v468, %v473
        %v478 = vrsqrt.pop %v465
        %v479 = vmul.f32 %v478, %v465
        %v480 = vmul.f32 %v479, %v478
        %v481 = vmul.f32 0.5, %v480
        %v482 = vsub.f32 1.5, %v481
        %v483 = vmul.f32 %v478, %v482
        %vm484 = vweird.f32 %v465
        %vm485 = vweird.f32 %v478
        %vm486 = vmor %vm484, %vm485
        %v487 = vsel %vm486, %v478, %v483
        %v488 = vrsqrt.pop %v466
        %v489 = vmul.f32 %v488, %v466
        %v490 = vmul.f32 %v489, %v488
        %v491 = vmul.f32 0.5, %v490
        %v492 = vsub.f32 1.5, %v491
        %v493 = vmul.f32 %v488, %v492
        %vm494 = vweird.f32 %v466
        %vm495 = vweird.f32 %v488
        %vm496 = vmor %vm494, %vm495
        %v497 = vsel %vm496, %v488, %v493
        %v498 = vrsqrt.pop %v467
        %v499 = vmul.f32 %v498, %v467
        %v500 = vmul.f32 %v499, %v498
        %v501 = vmul.f32 0.5, %v500
        %v502 = vsub.f32 1.5, %v501
        %v503 = vmul.f32 %v498, %v502
        %vm504 = vweird.f32 %v467
        %vm505 = vweird.f32 %v498
        %vm506 = vmor %vm504, %vm505
        %v507 = vsel %vm506, %v498, %v503
        %v508 = vmul.f32 %v477, 2.0
        %v509 = vmul.f32 %v487, 2.0
        %v510 = vmul.f32 %v497, 2.0
        %v511 = vmul.f32 %v507, 2.0
        %v512 = vmul.f32 %v369, %v508
        %v513 = vmul.f32 %v389, %v509
        %v514 = vmul.f32 %v409, %v510
        %v515 = vmul.f32 %v429, %v511
        %v516 = vld [vmem:[%s188] sm:$0xff]
        %v517 = vld [vmem:[%s188 + $0x8] sm:$0xff]
        %520 = vst [vmem:[#allocation1] ss:$2 sm:$0xff] %v516
        %s521 = scalar_lea.vmem [#allocation1], 16
        %522 = vst [vmem:[%s521] ss:$2 sm:$0xff] %v517
        %v523 = vld.sshfl [vmem:[#allocation1] sm:$0xff pattern:$0x75316420]
        %v524 = vld.sshfl [vmem:[#allocation1 + $0x8] sm:$0xff pattern:$0x75316420]
        %v525 = vld.sshfl [vmem:[#allocation1 + $0x10] sm:$0xff pattern:$0x75316420]
        %v526 = vld.sshfl [vmem:[#allocation1 + $0x18] sm:$0xff pattern:$0x75316420]
        %vm531 = vcmask 31744
        %v533 = vsel %vm531, %v195, 0
        %v536 = vsel %vm435, %v512, 0
        %v539 = vsel %vm435, %v513, 0
        %v542 = vsel %vm435, %v514, 0
        %v545 = vsel %vm435, %v515, 0
        %547 = vmatpush.msra.mxu0 0.0
        %548 = vmatpush.msra.mxu0 0.0
        %549 = vmatpush.msra.mxu0 0.0
        %550 = vmatpush.msra.mxu0 0.0
        %551 = vmatpush.msra.mxu0 0.0
        %552 = vmatpush.msra.mxu0 0.0
        %553 = vmatpush.msra.mxu0 0.0
        %554 = vmatpush.msra.mxu0 0.0
        %555 = vmatpush.msra.mxu0 0.0
        %556 = vmatpush.msra.mxu0 0.0
        %557 = vmatpush.msra.mxu0 0.0
        %558 = vmatpush.msra.mxu0 0.0
        %559 = vmatpush.msra.mxu0 0.0
        %560 = vmatpush.msra.mxu0 0.0
        %561 = vmatpush.msra.mxu0 0.0
        %562 = vmatpush.msra.mxu0 %v536
        %563 = vmatmul.f32.gmra.mxu0 %v533
        %v564 = vpop.f32.mrf.mxu0
        %v565 = vadd.f32 %v523, %v564
        %566 = vdwg.mxu0
        %567 = vmatpush.msra.mxu0 0.0
        %568 = vmatpush.msra.mxu0 0.0
        %569 = vmatpush.msra.mxu0 0.0
        %570 = vmatpush.msra.mxu0 0.0
        %571 = vmatpush.msra.mxu0 0.0
        %572 = vmatpush.msra.mxu0 0.0
        %573 = vmatpush.msra.mxu0 0.0
        %574 = vmatpush.msra.mxu0 0.0
        %575 = vmatpush.msra.mxu0 0.0
        %576 = vmatpush.msra.mxu0 0.0
        %577 = vmatpush.msra.mxu0 0.0
        %578 = vmatpush.msra.mxu0 0.0
        %579 = vmatpush.msra.mxu0 0.0
        %580 = vmatpush.msra.mxu0 0.0
        %581 = vmatpush.msra.mxu0 0.0
        %582 = vmatpush.msra.mxu0 %v539
        %583 = vmatmul.f32.gmra.mxu0 %v533
        %v584 = vpop.f32.mrf.mxu0
        %v585 = vadd.f32 %v524, %v584
        %586 = vdwg.mxu0
        %587 = vmatpush.msra.mxu0 0.0
        %588 = vmatpush.msra.mxu0 0.0
        %589 = vmatpush.msra.mxu0 0.0
        %590 = vmatpush.msra.mxu0 0.0
        %591 = vmatpush.msra.mxu0 0.0
        %592 = vmatpush.msra.mxu0 0.0
        %593 = vmatpush.msra.mxu0 0.0
        %594 = vmatpush.msra.mxu0 0.0
        %595 = vmatpush.msra.mxu0 0.0
        %596 = vmatpush.msra.mxu0 0.0
        %597 = vmatpush.msra.mxu0 0.0
        %598 = vmatpush.msra.mxu0 0.0
        %599 = vmatpush.msra.mxu0 0.0
        %600 = vmatpush.msra.mxu0 0.0
        %601 = vmatpush.msra.mxu0 0.0
        %602 = vmatpush.msra.mxu0 %v542
        %603 = vmatmul.f32.gmra.mxu0 %v533
        %v604 = vpop.f32.mrf.mxu0
        %v605 = vadd.f32 %v525, %v604
        %606 = vdwg.mxu0
        %607 = vmatpush.msra.mxu0 0.0
        %608 = vmatpush.msra.mxu0 0.0
        %609 = vmatpush.msra.mxu0 0.0
        %610 = vmatpush.msra.mxu0 0.0
        %611 = vmatpush.msra.mxu0 0.0
        %612 = vmatpush.msra.mxu0 0.0
        %613 = vmatpush.msra.mxu0 0.0
        %614 = vmatpush.msra.mxu0 0.0
        %615 = vmatpush.msra.mxu0 0.0
        %616 = vmatpush.msra.mxu0 0.0
        %617 = vmatpush.msra.mxu0 0.0
        %618 = vmatpush.msra.mxu0 0.0
        %619 = vmatpush.msra.mxu0 0.0
        %620 = vmatpush.msra.mxu0 0.0
        %621 = vmatpush.msra.mxu0 0.0
        %622 = vmatpush.msra.mxu0 %v545
        %623 = vmatmul.f32.gmra.mxu0 %v533
        %v624 = vpop.f32.mrf.mxu0
        %v625 = vadd.f32 %v526, %v624
        %626 = vdwg.mxu0
        %628 = vset.pattern.permute.xlu0 0
        %629 = vperm.xlu0 %628, %v198
        %v630 = vpop.permute.xlu0 %629
        %633 = vset.pattern.permute.xlu0 0
        %634 = vperm.xlu0 %633, %v199
        %v635 = vpop.permute.xlu0 %634
        %v638 = vsel %vm531, %v196, 0
        %v641 = vsel %vm531, %v197, 0
        %v644 = vsel %vm435, %v565, 0
        %v647 = vsel %vm435, %v585, 0
        %v650 = vsel %vm435, %v605, 0
        %v653 = vsel %vm435, %v625, 0
        %655 = vmatpush.msra.mxu0 0.0
        %656 = vmatpush.msra.mxu0 0.0
        %657 = vmatpush.msra.mxu0 0.0
        %658 = vmatpush.msra.mxu0 0.0
        %659 = vmatpush.msra.mxu0 0.0
        %660 = vmatpush.msra.mxu0 0.0
        %661 = vmatpush.msra.mxu0 0.0
        %662 = vmatpush.msra.mxu0 0.0
        %663 = vmatpush.msra.mxu0 0.0
        %664 = vmatpush.msra.mxu0 0.0
        %665 = vmatpush.msra.mxu0 0.0
        %666 = vmatpush.msra.mxu0 0.0
        %667 = vmatpush.msra.mxu0 0.0
        %668 = vmatpush.msra.mxu0 0.0
        %669 = vmatpush.msra.mxu0 0.0
        %670 = vmatpush.msra.mxu0 %v644
        %671 = vmatmul.f32.gmra.mxu0 %v638
        %v672 = vpop.f32.mrf.mxu0
        %v673 = vadd.f32 %v630, %v672
        %674 = vmatmul.f32.gmra.mxu0 %v641
        %v675 = vpop.f32.mrf.mxu0
        %v676 = vadd.f32 %v635, %v675
        %677 = vdwg.mxu0
        %678 = vmatpush.msra.mxu0 0.0
        %679 = vmatpush.msra.mxu0 0.0
        %680 = vmatpush.msra.mxu0 0.0
        %681 = vmatpush.msra.mxu0 0.0
        %682 = vmatpush.msra.mxu0 0.0
        %683 = vmatpush.msra.mxu0 0.0
        %684 = vmatpush.msra.mxu0 0.0
        %685 = vmatpush.msra.mxu0 0.0
        %686 = vmatpush.msra.mxu0 0.0
        %687 = vmatpush.msra.mxu0 0.0
        %688 = vmatpush.msra.mxu0 0.0
        %689 = vmatpush.msra.mxu0 0.0
        %690 = vmatpush.msra.mxu0 0.0
        %691 = vmatpush.msra.mxu0 0.0
        %692 = vmatpush.msra.mxu0 0.0
        %693 = vmatpush.msra.mxu0 %v647
        %694 = vmatmul.f32.gmra.mxu0 %v638
        %v695 = vpop.f32.mrf.mxu0
        %v696 = vadd.f32 %v630, %v695
        %697 = vmatmul.f32.gmra.mxu0 %v641
        %v698 = vpop.f32.mrf.mxu0
        %v699 = vadd.f32 %v635, %v698
        %700 = vdwg.mxu0
        %701 = vmatpush.msra.mxu0 0.0
        %702 = vmatpush.msra.mxu0 0.0
        %703 = vmatpush.msra.mxu0 0.0
        %704 = vmatpush.msra.mxu0 0.0
        %705 = vmatpush.msra.mxu0 0.0
        %706 = vmatpush.msra.mxu0 0.0
        %707 = vmatpush.msra.mxu0 0.0
        %708 = vmatpush.msra.mxu0 0.0
        %709 = vmatpush.msra.mxu0 0.0
        %710 = vmatpush.msra.mxu0 0.0
        %711 = vmatpush.msra.mxu0 0.0
        %712 = vmatpush.msra.mxu0 0.0
        %713 = vmatpush.msra.mxu0 0.0
        %714 = vmatpush.msra.mxu0 0.0
        %715 = vmatpush.msra.mxu0 0.0
        %716 = vmatpush.msra.mxu0 %v650
        %717 = vmatmul.f32.gmra.mxu0 %v638
        %v718 = vpop.f32.mrf.mxu0
        %v719 = vadd.f32 %v630, %v718
        %720 = vmatmul.f32.gmra.mxu0 %v641
        %v721 = vpop.f32.mrf.mxu0
        %v722 = vadd.f32 %v635, %v721
        %723 = vdwg.mxu0
        %724 = vmatpush.msra.mxu0 0.0
        %725 = vmatpush.msra.mxu0 0.0
        %726 = vmatpush.msra.mxu0 0.0
        %727 = vmatpush.msra.mxu0 0.0
        %728 = vmatpush.msra.mxu0 0.0
        %729 = vmatpush.msra.mxu0 0.0
        %730 = vmatpush.msra.mxu0 0.0
        %731 = vmatpush.msra.mxu0 0.0
        %732 = vmatpush.msra.mxu0 0.0
        %733 = vmatpush.msra.mxu0 0.0
        %734 = vmatpush.msra.mxu0 0.0
        %735 = vmatpush.msra.mxu0 0.0
        %736 = vmatpush.msra.mxu0 0.0
        %737 = vmatpush.msra.mxu0 0.0
        %738 = vmatpush.msra.mxu0 0.0
        %739 = vmatpush.msra.mxu0 %v653
        %740 = vmatmul.f32.gmra.mxu0 %v638
        %v741 = vpop.f32.mrf.mxu0
        %v742 = vadd.f32 %v630, %v741
        %743 = vmatmul.f32.gmra.mxu0 %v641
        %v744 = vpop.f32.mrf.mxu0
        %v745 = vadd.f32 %v635, %v744
        %746 = vdwg.mxu0
        %v747 = vmax.f32 %v673, 0.0
        %v748 = vmax.f32 %v696, 0.0
        %v749 = vmax.f32 %v719, 0.0
        %v750 = vmax.f32 %v742, 0.0
        %v751 = vmax.f32 %v676, 0.0
        %v752 = vmax.f32 %v699, 0.0
        %v753 = vmax.f32 %v722, 0.0
        %v754 = vmax.f32 %v745, 0.0
        %756 = vset.pattern.permute.xlu0 0
        %757 = vperm.xlu0 %756, %v202
        %v758 = vpop.permute.xlu0 %757
        %761 = vset.pattern.permute.xlu0 0
        %762 = vperm.xlu0 %761, %v203
        %v763 = vpop.permute.xlu0 %762
        %v766 = vsel %vm236, %v200, 0
        %v769 = vsel %vm236, %v201, 0
        %771 = vmatpush.msra.mxu0 0.0
        %772 = vmatpush.msra.mxu0 0.0
        %773 = vmatpush.msra.mxu0 0.0
        %774 = vmatpush.msra.mxu0 0.0
        %775 = vmatpush.msra.mxu0 0.0
        %776 = vmatpush.msra.mxu0 0.0
        %777 = vmatpush.msra.mxu0 0.0
        %778 = vmatpush.msra.mxu0 0.0
        %779 = vmatpush.msra.mxu0 0.0
        %780 = vmatpush.msra.mxu0 0.0
        %781 = vmatpush.msra.mxu0 0.0
        %782 = vmatpush.msra.mxu0 0.0
        %783 = vmatpush.msra.mxu0 0.0
        %784 = vmatpush.msra.mxu0 0.0
        %785 = vmatpush.msra.mxu0 %v751
        %786 = vmatpush.msra.mxu0 %v747
        %787 = vmatmul.f32.gmra.mxu0 %v766
        %v788 = vpop.f32.mrf.mxu0
        %v789 = vadd.f32 %v758, %v788
        %790 = vmatmul.f32.gmra.mxu0 %v769
        %v791 = vpop.f32.mrf.mxu0
        %v792 = vadd.f32 %v763, %v791
        %793 = vdwg.mxu0
        %794 = vmatpush.msra.mxu0 0.0
        %795 = vmatpush.msra.mxu0 0.0
        %796 = vmatpush.msra.mxu0 0.0
        %797 = vmatpush.msra.mxu0 0.0
        %798 = vmatpush.msra.mxu0 0.0
        %799 = vmatpush.msra.mxu0 0.0
        %800 = vmatpush.msra.mxu0 0.0
        %801 = vmatpush.msra.mxu0 0.0
        %802 = vmatpush.msra.mxu0 0.0
        %803 = vmatpush.msra.mxu0 0.0
        %804 = vmatpush.msra.mxu0 0.0
        %805 = vmatpush.msra.mxu0 0.0
        %806 = vmatpush.msra.mxu0 0.0
        %807 = vmatpush.msra.mxu0 0.0
        %808 = vmatpush.msra.mxu0 %v752
        %809 = vmatpush.msra.mxu0 %v748
        %810 = vmatmul.f32.gmra.mxu0 %v766
        %v811 = vpop.f32.mrf.mxu0
        %v812 = vadd.f32 %v758, %v811
        %813 = vmatmul.f32.gmra.mxu0 %v769
        %v814 = vpop.f32.mrf.mxu0
        %v815 = vadd.f32 %v763, %v814
        %816 = vdwg.mxu0
        %817 = vmatpush.msra.mxu0 0.0
        %818 = vmatpush.msra.mxu0 0.0
        %819 = vmatpush.msra.mxu0 0.0
        %820 = vmatpush.msra.mxu0 0.0
        %821 = vmatpush.msra.mxu0 0.0
        %822 = vmatpush.msra.mxu0 0.0
        %823 = vmatpush.msra.mxu0 0.0
        %824 = vmatpush.msra.mxu0 0.0
        %825 = vmatpush.msra.mxu0 0.0
        %826 = vmatpush.msra.mxu0 0.0
        %827 = vmatpush.msra.mxu0 0.0
        %828 = vmatpush.msra.mxu0 0.0
        %829 = vmatpush.msra.mxu0 0.0
        %830 = vmatpush.msra.mxu0 0.0
        %831 = vmatpush.msra.mxu0 %v753
        %832 = vmatpush.msra.mxu0 %v749
        %833 = vmatmul.f32.gmra.mxu0 %v766
        %v834 = vpop.f32.mrf.mxu0
        %v835 = vadd.f32 %v758, %v834
        %836 = vmatmul.f32.gmra.mxu0 %v769
        %v837 = vpop.f32.mrf.mxu0
        %v838 = vadd.f32 %v763, %v837
        %839 = vdwg.mxu0
        %840 = vmatpush.msra.mxu0 0.0
        %841 = vmatpush.msra.mxu0 0.0
        %842 = vmatpush.msra.mxu0 0.0
        %843 = vmatpush.msra.mxu0 0.0
        %844 = vmatpush.msra.mxu0 0.0
        %845 = vmatpush.msra.mxu0 0.0
        %846 = vmatpush.msra.mxu0 0.0
        %847 = vmatpush.msra.mxu0 0.0
        %848 = vmatpush.msra.mxu0 0.0
        %849 = vmatpush.msra.mxu0 0.0
        %850 = vmatpush.msra.mxu0 0.0
        %851 = vmatpush.msra.mxu0 0.0
        %852 = vmatpush.msra.mxu0 0.0
        %853 = vmatpush.msra.mxu0 0.0
        %854 = vmatpush.msra.mxu0 %v754
        %855 = vmatpush.msra.mxu0 %v750
        %856 = vmatmul.f32.gmra.mxu0 %v766
        %v857 = vpop.f32.mrf.mxu0
        %v858 = vadd.f32 %v758, %v857
        %859 = vmatmul.f32.gmra.mxu0 %v769
        %v860 = vpop.f32.mrf.mxu0
        %v861 = vadd.f32 %v763, %v860
        %862 = vdwg.mxu0
        %863 = vst [vmem:[%s178] sm:$0xff] %v789
        %864 = vst [vmem:[%s178 + $0x8] sm:$0xff] %v812
        %865 = vst [vmem:[%s178 + $0x10] sm:$0xff] %v835
        %866 = vst [vmem:[%s178 + $0x18] sm:$0xff] %v858
        %867 = vst [vmem:[%s178 + $0x20] sm:$0xff] %v792
        %868 = vst [vmem:[%s178 + $0x28] sm:$0xff] %v815
        %869 = vst [vmem:[%s178 + $0x30] sm:$0xff] %v838
        %870 = vst [vmem:[%s178 + $0x38] sm:$0xff] %v861
        %s871 = sand.u32 %s98, 1
        %s872 = scalar_lea.sflag [#allocation3], %s871
        %s873 = sand.u32 %s98, 1
        %s874 = smul.addr %s873, 64
        %s875 = scalar_lea.vmem [#allocation2], %s874
        // Predicated region
        $region33: #{tpu_custom_call.1} parent=31 // pred_check
          %p876 = pneg %p108
        $region34: #{tpu_custom_call.1} parent=31 // pred_check_branch
          %878 = sbr.rel (%p876) target = $region36
        $region35: #{tpu_custom_call.1} parent=31 // pred_region
          %s879 = smul.u32 4, %s17
          %881 = vsyncadd %s872, 0
          %s882 = smul.addr %s879, 8
          %s883 = scalar_lea.hbm %s3, %s882
          %s884 = sshll.u32 %s875, 4
          %s885 = int_to_ptr.vmem [resolvable:$true] %s884
          %s886 = sshll.u32 %s883, 4
          %s887 = int_to_ptr.hbm [resolvable:$true] %s886
          %892 = dma.vmem_to_hbm [thread:$0]  %s885, 1024, %s887, %s872, 512, 1024, 32
        $region36: #{tpu_custom_call.1} parent=31 // pred_fallthru
          _
      $region32: #{tpu_custom_call.1} parent=5 // pred_fallthru
        _
      %p893 = scmp.le.s32.totalorder 2, %s12
      // Predicated region
      $region37: #{tpu_custom_call.1} parent=5 // pred_check
        %p894 = pneg %p893
      $region38: #{tpu_custom_call.1} parent=5 // pred_check_branch
        %896 = sbr.rel (%p894) target = $region40
      $region39: #{tpu_custom_call.1} parent=5 // pred_region
        %s897 = ssub.s32 %s12, 2
        // Predicated region
        $region41: #{tpu_custom_call.1} parent=39 // pred_check
          %p898 = pneg %p114
        $region42: #{tpu_custom_call.1} parent=39 // pred_check_branch
          %900 = sbr.rel (%p898) target = $region44
        $region43: #{tpu_custom_call.1} parent=39 // pred_region
          %s901 = sand.u32 %s99, 1
          %s902 = scalar_lea.sflag [#allocation3], %s901
          %s903 = sand.u32 %s99, 1
          %s904 = smul.addr %s903, 64
          %s905 = scalar_lea.vmem [#allocation2], %s904
          %907 = dma.done %s902, 1024
        $region44: #{tpu_custom_call.1} parent=39 // pred_fallthru
          _
      $region40: #{tpu_custom_call.1} parent=5 // pred_fallthru
        _
    $region6: #{tpu_custom_call.1} parent=1 // loop_footer
      %s16 = sadd.s32 1, %s12
    $region7: #{tpu_custom_call.1} parent=1 // loop_footer_branch
      %11 = sbr.rel target = $region3
    $region8: #{tpu_custom_call.1} parent=1 // loop_exit
      _
    %908 = vsyncpa [#allocation3], 1
    %s909 = scalar_lea.sflag [#allocation3], 1
    %910 = vsyncpa %s909, 1

</llo_original>
